<compile_context>
chip_gen: v5e
topology: v5e:2x2
jax: 0.10.0
libtpu: 0.0.40
codegen_flags: <defaults>
</compile_context>

<pallas_src>
import jax
import jax.numpy as jnp
import numpy as np
from jax import lax
from jax.experimental import pallas as pl
from jax.experimental.pallas import tpu as pltpu


def _make_unet_up_kernel(H, W, Cin, c_tile, eps=1e-5):
    """Fused kernel: one (batch, output-channel-tile) block per grid step."""

    def kernel(xp_ref, w_ref, o_ref):
        # xp_ref: (1, H+2, W+2, Cin) f32  zero-padded NHWC input (1px halo)
        # w_ref:  (4, 4*Cin, c_tile) bf16 per-phase tap-packed weights
        # o_ref:  (1, 4, H*W, c_tile)     phase-separated, normalized output
        xp = xp_ref[0]  # (H+2, W+2, Cin)

        # Hoist the 9 distinct shifted views; each is reused by up to 4 phases.
        xv = [[xp[a:a + H, b:b + W, :].reshape(H * W, Cin) for b in range(3)]
              for a in range(3)]

        # ConvTranspose2d(k=4, s=2, p=1): out[2a+ph, 2b+pw] sums the four taps
        # (dh, dw) of x[a+ph+dh-1, b+pw+dw-1] @ W[:, :, 3-2dh-ph, 3-2dw-pw].
        # All four taps are fused into one K=4*Cin MXU matmul per phase; the
        # matching packed weight w_ref[p] was built in the wrapper.
        accs = []
        for ph in range(2):
            for pw in range(2):
                p = 2 * ph + pw
                xcat = jnp.concatenate(
                    [xv[ph][pw], xv[ph][pw + 1],
                     xv[ph + 1][pw], xv[ph + 1][pw + 1]], axis=-1)
                accs.append(jnp.dot(xcat.astype(jnp.bfloat16), w_ref[p],
                                    preferred_element_type=jnp.float32))

        # InstanceNorm2d(affine=False): per-channel mean / biased variance over
        # all 4*H*W output pixels, computed in one pass over the resident
        # accumulators (E[x^2] - E[x]^2).  The conv bias is omitted entirely —
        # it cancels exactly under the mean subtraction.
        s1 = jnp.zeros((1, c_tile), jnp.float32)
        s2 = jnp.zeros((1, c_tile), jnp.float32)
        for acc in accs:
            s1 = s1 + jnp.sum(acc, axis=0, keepdims=True)
            s2 = s2 + jnp.sum(acc * acc, axis=0, keepdims=True)
        inv_n = 1.0 / (4.0 * H * W)
        mean = s1 * inv_n
        var = jnp.maximum(s2 * inv_n - mean * mean, 0.0)
        scale = lax.rsqrt(var + eps)

        # Normalize + ReLU (fused) and store each phase slab directly.
        for p, acc in enumerate(accs):
            o_ref[0, p] = jnp.maximum((acc - mean) * scale,
                                      0.0).astype(o_ref.dtype)

    return kernel


def unet_up_forward(x_nchw, skip_nchw, w_pt, b=None, eps=1e-5, c_tile=None):
    """UNetUp forward.
    x_nchw: (N, Cin, H, W); skip_nchw: (N, Csk, 2H, 2W);
    w_pt: (Cin, Cout, 4, 4) PyTorch ConvTranspose2d weight;
    b: (Cout,) conv bias — accepted but unused (it cancels exactly under
    InstanceNorm2d(affine=False))."""
    del b
    N, Cin, H, W = x_nchw.shape
    Cout = w_pt.shape[1]

    if c_tile is None:
        c_tile = 128 if (Cout > 128 and Cout % 128 == 0) else Cout
    assert Cout % c_tile == 0
    n_ct = Cout // c_tile

    # NCHW -> NHWC (channels on lanes) + 1px zero halo for the boundary taps.
    # TODO(synk): fold the halo into the kernel (masked edge taps) to avoid this
    # extra HBM round-trip of the input.
    x = jnp.transpose(x_nchw, (0, 2, 3, 1))
    xp = jnp.pad(x, ((0, 0), (1, 1), (1, 1), (0, 0)))

    # Pack the ConvTranspose2d weight into one (4*Cin, Cout) matrix per output
    # parity phase p = 2*ph + pw; tap order (dh, dw) = (0,0),(0,1),(1,0),(1,1)
    # matches the in-kernel input concat. Cast to bf16 for the MXU.
    w_phase = []
    for ph in range(2):
        for pw in range(2):
            taps = []
            for dh in range(2):
                for dw in range(2):
                    taps.append(w_pt[:, :, 3 - 2 * dh - ph, 3 - 2 * dw - pw])
            w_phase.append(jnp.concatenate(taps, axis=0))        # (4*Cin, Cout)
    w_packed = jnp.stack(w_phase, axis=0).astype(jnp.bfloat16)   # (4, 4*Cin, Cout)

    kernel = _make_unet_up_kernel(H, W, Cin, c_tile, eps)

    # Phase-separated output: y_k[n, 2*ph+pw, a*W+b, c] = conv_t[n, 2a+ph, 2b+pw, c],
    # already instance-normalized + ReLU'd.
    # TODO(synk): for very large H, W add a spatial row-tile grid axis with a
    # two-pass (sum/sumsq then normalize) instance norm to fit v7x's 64 MiB VMEM.
    y_k = pl.pallas_call(
        kernel,
        out_shape=jax.ShapeDtypeStruct((N, 4, H * W, Cout), x_nchw.dtype),
        grid_spec=pltpu.PrefetchScalarGridSpec(
            num_scalar_prefetch=0,
            grid=(N, n_ct),
            in_specs=[
                pl.BlockSpec((1, H + 2, W + 2, Cin), lambda n, j: (n, 0, 0, 0)),
                pl.BlockSpec((4, 4 * Cin, c_tile), lambda n, j: (0, 0, j)),
            ],
            out_specs=pl.BlockSpec((1, 4, H * W, c_tile),
                                   lambda n, j: (n, 0, 0, j)),
        ),
        compiler_params=pltpu.CompilerParams(
            dimension_semantics=("parallel", "parallel")),
    )(xp, w_packed)

    # Pixel-shuffle interleave + NHWC->NCHW folded into one XLA transpose.
    y_nchw = jnp.transpose(
        y_k.reshape(N, 2, 2, H, W, Cout), (0, 5, 3, 1, 4, 2)
    ).reshape(N, Cout, 2 * H, 2 * W)

    # Skip concat stays in the wrapper (pure layout, no kernel traffic).
    # TODO(synk): nn.Dropout branch (only built when dropout > 0; default 0.0) is omitted.
    return jnp.concatenate([y_nchw, skip_nchw], axis=1)


def _reference(x, skip, w_pt, b, eps=1e-5):
    """Pure-JAX reference matching PyTorch semantics (NCHW, f32, with bias)."""
    w_conv = jnp.transpose(w_pt, (1, 0, 2, 3))[:, :, ::-1, ::-1]
    y = lax.conv_general_dilated(
        x, w_conv, window_strides=(1, 1), padding=((2, 2), (2, 2)),
        lhs_dilation=(2, 2), dimension_numbers=("NCHW", "OIHW", "NCHW"))
    y = y + b[None, :, None, None]
    mean = jnp.mean(y, axis=(2, 3), keepdims=True)
    var = jnp.mean((y - mean) ** 2, axis=(2, 3), keepdims=True)
    y = jnp.maximum((y - mean) / jnp.sqrt(var + eps), 0.0)
    return jnp.concatenate([y, skip], axis=1)


if __name__ == "__main__":
    key = jax.random.PRNGKey(0)
    k1, k2, k3, k4 = jax.random.split(key, 4)

    N, Cin, Cout, H, W = 2, 8, 4, 8, 8
    x = jax.random.normal(k1, (N, Cin, H, W), jnp.float32)
    skip = jax.random.normal(k2, (N, Cout, 2 * H, 2 * W), jnp.float32)
    # Deterministic synthetic parameters (ConvTranspose2d(in=8, out=4, k=4)).
    w = jax.random.normal(k3, (Cin, Cout, 4, 4), jnp.float32) * 0.1
    b = jax.random.normal(k4, (Cout,), jnp.float32) * 0.1

    out = jax.block_until_ready(unet_up_forward(x, skip, w, b))
    assert out.shape == (N, Cout + Cout, 2 * H, 2 * W), out.shape

    ref = _reference(x, skip, w, b)
    # bf16 MXU operands (f32 accumulate / f32 norm math) -> loosen tolerance a bit.
    np.testing.assert_allclose(np.asarray(out), np.asarray(ref),
                               atol=2e-2, rtol=2e-2)
    print("KERNEL_OK")
</pallas_src>

<mosaic_0001>
module attributes {stable_mosaic.version = 11 : i64} {
  func.func @kernel(%arg0: i32, %arg1: i32, %arg2: memref<1x10x10x8xf32, #tpu.memory_space<vmem>>, %arg3: memref<4x32x4xbf16, #tpu.memory_space<vmem>>, %arg4: memref<1x4x64x4xf32, #tpu.memory_space<vmem>>) attributes {dimension_semantics = [#tpu.dimension_semantics<parallel>, #tpu.dimension_semantics<parallel>], iteration_bounds = array<i64: 2, 1>, scalar_prefetch = 0 : i64, scratch_operands = 0 : i64, tpu.core_type = #tpu.core_type<tc>, window_params = [{transform_indices = @transform_0, window_bounds = array<i64: 1, 10, 10, 8>}, {transform_indices = @transform_1, window_bounds = array<i64: 4, 32, 4>}, {transform_indices = @transform_2, window_bounds = array<i64: 1, 4, 64, 4>}]} {
    %c0 = arith.constant 0 : index
    %c0_0 = arith.constant 0 : index
    %c0_1 = arith.constant 0 : index
    %c0_2 = arith.constant 0 : index
    %0 = vector.load %arg2[%c0, %c0_0, %c0_1, %c0_2] : memref<1x10x10x8xf32, #tpu.memory_space<vmem>>, vector<1x10x10x8xf32>
    %1 = vector.shape_cast %0 : vector<1x10x10x8xf32> to vector<10x10x8xf32>
    %2 = vector.extract_strided_slice %1 {offsets = [0, 0, 0], sizes = [8, 8, 8], strides = [1, 1, 1]} : vector<10x10x8xf32> to vector<8x8x8xf32>
    %3 = vector.shape_cast %2 : vector<8x8x8xf32> to vector<64x8xf32>
    %4 = vector.extract_strided_slice %1 {offsets = [0, 1, 0], sizes = [8, 8, 8], strides = [1, 1, 1]} : vector<10x10x8xf32> to vector<8x8x8xf32>
    %5 = vector.shape_cast %4 : vector<8x8x8xf32> to vector<64x8xf32>
    %6 = vector.extract_strided_slice %1 {offsets = [0, 2, 0], sizes = [8, 8, 8], strides = [1, 1, 1]} : vector<10x10x8xf32> to vector<8x8x8xf32>
    %7 = vector.shape_cast %6 : vector<8x8x8xf32> to vector<64x8xf32>
    %8 = vector.extract_strided_slice %1 {offsets = [1, 0, 0], sizes = [8, 8, 8], strides = [1, 1, 1]} : vector<10x10x8xf32> to vector<8x8x8xf32>
    %9 = vector.shape_cast %8 : vector<8x8x8xf32> to vector<64x8xf32>
    %10 = vector.extract_strided_slice %1 {offsets = [1, 1, 0], sizes = [8, 8, 8], strides = [1, 1, 1]} : vector<10x10x8xf32> to vector<8x8x8xf32>
    %11 = vector.shape_cast %10 : vector<8x8x8xf32> to vector<64x8xf32>
    %12 = vector.extract_strided_slice %1 {offsets = [1, 2, 0], sizes = [8, 8, 8], strides = [1, 1, 1]} : vector<10x10x8xf32> to vector<8x8x8xf32>
    %13 = vector.shape_cast %12 : vector<8x8x8xf32> to vector<64x8xf32>
    %14 = vector.extract_strided_slice %1 {offsets = [2, 0, 0], sizes = [8, 8, 8], strides = [1, 1, 1]} : vector<10x10x8xf32> to vector<8x8x8xf32>
    %15 = vector.shape_cast %14 : vector<8x8x8xf32> to vector<64x8xf32>
    %16 = vector.extract_strided_slice %1 {offsets = [2, 1, 0], sizes = [8, 8, 8], strides = [1, 1, 1]} : vector<10x10x8xf32> to vector<8x8x8xf32>
    %17 = vector.shape_cast %16 : vector<8x8x8xf32> to vector<64x8xf32>
    %18 = vector.extract_strided_slice %1 {offsets = [2, 2, 0], sizes = [8, 8, 8], strides = [1, 1, 1]} : vector<10x10x8xf32> to vector<8x8x8xf32>
    %19 = vector.shape_cast %18 : vector<8x8x8xf32> to vector<64x8xf32>
    %20 = tpu.concatenate %3, %5, %9, %11 in 1 : vector<64x8xf32>, vector<64x8xf32>, vector<64x8xf32>, vector<64x8xf32> -> vector<64x32xf32>
    %21 = arith.truncf %20 : vector<64x32xf32> to vector<64x32xbf16>
    %c0_3 = arith.constant 0 : index
    %c0_4 = arith.constant 0 : index
    %c0_5 = arith.constant 0 : index
    %22 = vector.load %arg3[%c0_3, %c0_4, %c0_5] : memref<4x32x4xbf16, #tpu.memory_space<vmem>>, vector<1x32x4xbf16>
    %23 = vector.shape_cast %22 : vector<1x32x4xbf16> to vector<32x4xbf16>
    %cst = arith.constant dense<0.000000e+00> : vector<64x4xf32>
    %24 = tpu.matmul %21, %23, %cst {dimension_numbers = #tpu.dot_dimension_numbers<[1], [0], [0], [1], [0, 0, 1, 1], [], []>} : vector<64x32xbf16>, vector<32x4xbf16>, vector<64x4xf32> -> vector<64x4xf32>
    %25 = tpu.concatenate %5, %7, %11, %13 in 1 : vector<64x8xf32>, vector<64x8xf32>, vector<64x8xf32>, vector<64x8xf32> -> vector<64x32xf32>
    %26 = arith.truncf %25 : vector<64x32xf32> to vector<64x32xbf16>
    %c1 = arith.constant 1 : index
    %c0_6 = arith.constant 0 : index
    %c0_7 = arith.constant 0 : index
    %27 = vector.load %arg3[%c1, %c0_6, %c0_7] : memref<4x32x4xbf16, #tpu.memory_space<vmem>>, vector<1x32x4xbf16>
    %28 = vector.shape_cast %27 : vector<1x32x4xbf16> to vector<32x4xbf16>
    %cst_8 = arith.constant dense<0.000000e+00> : vector<64x4xf32>
    %29 = tpu.matmul %26, %28, %cst_8 {dimension_numbers = #tpu.dot_dimension_numbers<[1], [0], [0], [1], [0, 0, 1, 1], [], []>} : vector<64x32xbf16>, vector<32x4xbf16>, vector<64x4xf32> -> vector<64x4xf32>
    %30 = tpu.concatenate %9, %11, %15, %17 in 1 : vector<64x8xf32>, vector<64x8xf32>, vector<64x8xf32>, vector<64x8xf32> -> vector<64x32xf32>
    %31 = arith.truncf %30 : vector<64x32xf32> to vector<64x32xbf16>
    %c2 = arith.constant 2 : index
    %c0_9 = arith.constant 0 : index
    %c0_10 = arith.constant 0 : index
    %32 = vector.load %arg3[%c2, %c0_9, %c0_10] : memref<4x32x4xbf16, #tpu.memory_space<vmem>>, vector<1x32x4xbf16>
    %33 = vector.shape_cast %32 : vector<1x32x4xbf16> to vector<32x4xbf16>
    %cst_11 = arith.constant dense<0.000000e+00> : vector<64x4xf32>
    %34 = tpu.matmul %31, %33, %cst_11 {dimension_numbers = #tpu.dot_dimension_numbers<[1], [0], [0], [1], [0, 0, 1, 1], [], []>} : vector<64x32xbf16>, vector<32x4xbf16>, vector<64x4xf32> -> vector<64x4xf32>
    %35 = tpu.concatenate %11, %13, %17, %19 in 1 : vector<64x8xf32>, vector<64x8xf32>, vector<64x8xf32>, vector<64x8xf32> -> vector<64x32xf32>
    %36 = arith.truncf %35 : vector<64x32xf32> to vector<64x32xbf16>
    %c3 = arith.constant 3 : index
    %c0_12 = arith.constant 0 : index
    %c0_13 = arith.constant 0 : index
    %37 = vector.load %arg3[%c3, %c0_12, %c0_13] : memref<4x32x4xbf16, #tpu.memory_space<vmem>>, vector<1x32x4xbf16>
    %38 = vector.shape_cast %37 : vector<1x32x4xbf16> to vector<32x4xbf16>
    %cst_14 = arith.constant dense<0.000000e+00> : vector<64x4xf32>
    %39 = tpu.matmul %36, %38, %cst_14 {dimension_numbers = #tpu.dot_dimension_numbers<[1], [0], [0], [1], [0, 0, 1, 1], [], []>} : vector<64x32xbf16>, vector<32x4xbf16>, vector<64x4xf32> -> vector<64x4xf32>
    %cst_15 = arith.constant 0.000000e+00 : f32
    %40 = vector.broadcast %cst_15 : f32 to vector<1x4xf32>
    %cst_16 = arith.constant 0.000000e+00 : f32
    %41 = vector.broadcast %cst_16 : f32 to vector<1x4xf32>
    %cst_17 = arith.constant dense<0.000000e+00> : vector<4xf32>
    %42 = vector.multi_reduction <add>, %24, %cst_17 [0] : vector<64x4xf32> to vector<4xf32>
    %43 = vector.shape_cast %42 : vector<4xf32> to vector<1x4xf32>
    %44 = arith.addf %40, %43 : vector<1x4xf32>
    %45 = arith.mulf %24, %24 : vector<64x4xf32>
    %cst_18 = arith.constant dense<0.000000e+00> : vector<4xf32>
    %46 = vector.multi_reduction <add>, %45, %cst_18 [0] : vector<64x4xf32> to vector<4xf32>
    %47 = vector.shape_cast %46 : vector<4xf32> to vector<1x4xf32>
    %48 = arith.addf %41, %47 : vector<1x4xf32>
    %cst_19 = arith.constant dense<0.000000e+00> : vector<4xf32>
    %49 = vector.multi_reduction <add>, %29, %cst_19 [0] : vector<64x4xf32> to vector<4xf32>
    %50 = vector.shape_cast %49 : vector<4xf32> to vector<1x4xf32>
    %51 = arith.addf %44, %50 : vector<1x4xf32>
    %52 = arith.mulf %29, %29 : vector<64x4xf32>
    %cst_20 = arith.constant dense<0.000000e+00> : vector<4xf32>
    %53 = vector.multi_reduction <add>, %52, %cst_20 [0] : vector<64x4xf32> to vector<4xf32>
    %54 = vector.shape_cast %53 : vector<4xf32> to vector<1x4xf32>
    %55 = arith.addf %48, %54 : vector<1x4xf32>
    %cst_21 = arith.constant dense<0.000000e+00> : vector<4xf32>
    %56 = vector.multi_reduction <add>, %34, %cst_21 [0] : vector<64x4xf32> to vector<4xf32>
    %57 = vector.shape_cast %56 : vector<4xf32> to vector<1x4xf32>
    %58 = arith.addf %51, %57 : vector<1x4xf32>
    %59 = arith.mulf %34, %34 : vector<64x4xf32>
    %cst_22 = arith.constant dense<0.000000e+00> : vector<4xf32>
    %60 = vector.multi_reduction <add>, %59, %cst_22 [0] : vector<64x4xf32> to vector<4xf32>
    %61 = vector.shape_cast %60 : vector<4xf32> to vector<1x4xf32>
    %62 = arith.addf %55, %61 : vector<1x4xf32>
    %cst_23 = arith.constant dense<0.000000e+00> : vector<4xf32>
    %63 = vector.multi_reduction <add>, %39, %cst_23 [0] : vector<64x4xf32> to vector<4xf32>
    %64 = vector.shape_cast %63 : vector<4xf32> to vector<1x4xf32>
    %65 = arith.addf %58, %64 : vector<1x4xf32>
    %66 = arith.mulf %39, %39 : vector<64x4xf32>
    %cst_24 = arith.constant dense<0.000000e+00> : vector<4xf32>
    %67 = vector.multi_reduction <add>, %66, %cst_24 [0] : vector<64x4xf32> to vector<4xf32>
    %68 = vector.shape_cast %67 : vector<4xf32> to vector<1x4xf32>
    %69 = arith.addf %62, %68 : vector<1x4xf32>
    %cst_25 = arith.constant 3.906250e-03 : f32
    %70 = vector.broadcast %cst_25 : f32 to vector<1x4xf32>
    %71 = arith.mulf %65, %70 : vector<1x4xf32>
    %cst_26 = arith.constant 3.906250e-03 : f32
    %72 = vector.broadcast %cst_26 : f32 to vector<1x4xf32>
    %73 = arith.mulf %69, %72 : vector<1x4xf32>
    %74 = arith.mulf %71, %71 : vector<1x4xf32>
    %75 = arith.subf %73, %74 : vector<1x4xf32>
    %cst_27 = arith.constant 0.000000e+00 : f32
    %76 = vector.broadcast %cst_27 : f32 to vector<1x4xf32>
    %77 = arith.maximumf %75, %76 : vector<1x4xf32>
    %cst_28 = arith.constant 9.99999974E-6 : f32
    %78 = vector.broadcast %cst_28 : f32 to vector<1x4xf32>
    %79 = arith.addf %77, %78 : vector<1x4xf32>
    %80 = math.rsqrt %79 : vector<1x4xf32>
    %81 = vector.broadcast %71 : vector<1x4xf32> to vector<64x4xf32>
    %82 = arith.subf %24, %81 : vector<64x4xf32>
    %83 = vector.broadcast %80 : vector<1x4xf32> to vector<64x4xf32>
    %84 = arith.mulf %82, %83 : vector<64x4xf32>
    %cst_29 = arith.constant 0.000000e+00 : f32
    %85 = vector.broadcast %cst_29 : f32 to vector<64x4xf32>
    %86 = arith.maximumf %84, %85 : vector<64x4xf32>
    %c0_30 = arith.constant 0 : index
    %c0_31 = arith.constant 0 : index
    %c0_32 = arith.constant 0 : index
    %c0_33 = arith.constant 0 : index
    %87 = vector.load %arg4[%c0_30, %c0_31, %c0_32, %c0_33] : memref<1x4x64x4xf32, #tpu.memory_space<vmem>>, vector<1x1x64x4xf32>
    %88 = vector.shape_cast %87 : vector<1x1x64x4xf32> to vector<64x4xf32>
    %89 = vector.shape_cast %86 : vector<64x4xf32> to vector<1x1x64x4xf32>
    tpu.vector_store %arg4[%c0_30, %c0_31, %c0_32, %c0_33], %89 {strides = array<i32>} : memref<1x4x64x4xf32, #tpu.memory_space<vmem>>, vector<1x1x64x4xf32>,
    %90 = vector.broadcast %71 : vector<1x4xf32> to vector<64x4xf32>
    %91 = arith.subf %29, %90 : vector<64x4xf32>
    %92 = vector.broadcast %80 : vector<1x4xf32> to vector<64x4xf32>
    %93 = arith.mulf %91, %92 : vector<64x4xf32>
    %cst_34 = arith.constant 0.000000e+00 : f32
    %94 = vector.broadcast %cst_34 : f32 to vector<64x4xf32>
    %95 = arith.maximumf %93, %94 : vector<64x4xf32>
    %c0_35 = arith.constant 0 : index
    %c1_36 = arith.constant 1 : index
    %c0_37 = arith.constant 0 : index
    %c0_38 = arith.constant 0 : index
    %96 = vector.load %arg4[%c0_35, %c1_36, %c0_37, %c0_38] : memref<1x4x64x4xf32, #tpu.memory_space<vmem>>, vector<1x1x64x4xf32>
    %97 = vector.shape_cast %96 : vector<1x1x64x4xf32> to vector<64x4xf32>
    %98 = vector.shape_cast %95 : vector<64x4xf32> to vector<1x1x64x4xf32>
    tpu.vector_store %arg4[%c0_35, %c1_36, %c0_37, %c0_38], %98 {strides = array<i32>} : memref<1x4x64x4xf32, #tpu.memory_space<vmem>>, vector<1x1x64x4xf32>,
    %99 = vector.broadcast %71 : vector<1x4xf32> to vector<64x4xf32>
    %100 = arith.subf %34, %99 : vector<64x4xf32>
    %101 = vector.broadcast %80 : vector<1x4xf32> to vector<64x4xf32>
    %102 = arith.mulf %100, %101 : vector<64x4xf32>
    %cst_39 = arith.constant 0.000000e+00 : f32
    %103 = vector.broadcast %cst_39 : f32 to vector<64x4xf32>
    %104 = arith.maximumf %102, %103 : vector<64x4xf32>
    %c0_40 = arith.constant 0 : index
    %c2_41 = arith.constant 2 : index
    %c0_42 = arith.constant 0 : index
    %c0_43 = arith.constant 0 : index
    %105 = vector.load %arg4[%c0_40, %c2_41, %c0_42, %c0_43] : memref<1x4x64x4xf32, #tpu.memory_space<vmem>>, vector<1x1x64x4xf32>
    %106 = vector.shape_cast %105 : vector<1x1x64x4xf32> to vector<64x4xf32>
    %107 = vector.shape_cast %104 : vector<64x4xf32> to vector<1x1x64x4xf32>
    tpu.vector_store %arg4[%c0_40, %c2_41, %c0_42, %c0_43], %107 {strides = array<i32>} : memref<1x4x64x4xf32, #tpu.memory_space<vmem>>, vector<1x1x64x4xf32>,
    %108 = vector.broadcast %71 : vector<1x4xf32> to vector<64x4xf32>
    %109 = arith.subf %39, %108 : vector<64x4xf32>
    %110 = vector.broadcast %80 : vector<1x4xf32> to vector<64x4xf32>
    %111 = arith.mulf %109, %110 : vector<64x4xf32>
    %cst_44 = arith.constant 0.000000e+00 : f32
    %112 = vector.broadcast %cst_44 : f32 to vector<64x4xf32>
    %113 = arith.maximumf %111, %112 : vector<64x4xf32>
    %c0_45 = arith.constant 0 : index
    %c3_46 = arith.constant 3 : index
    %c0_47 = arith.constant 0 : index
    %c0_48 = arith.constant 0 : index
    %114 = vector.load %arg4[%c0_45, %c3_46, %c0_47, %c0_48] : memref<1x4x64x4xf32, #tpu.memory_space<vmem>>, vector<1x1x64x4xf32>
    %115 = vector.shape_cast %114 : vector<1x1x64x4xf32> to vector<64x4xf32>
    %116 = vector.shape_cast %113 : vector<64x4xf32> to vector<1x1x64x4xf32>
    tpu.vector_store %arg4[%c0_45, %c3_46, %c0_47, %c0_48], %116 {strides = array<i32>} : memref<1x4x64x4xf32, #tpu.memory_space<vmem>>, vector<1x1x64x4xf32>,
    return
  }
  func.func @transform_0(%arg0: i32, %arg1: i32) -> (i32, i32, i32, i32) {
    %c0_i32 = arith.constant 0 : i32
    %c0_i32_0 = arith.constant 0 : i32
    %c0_i32_1 = arith.constant 0 : i32
    %c0_i32_2 = arith.constant 0 : i32
    return %arg0, %c0_i32, %c0_i32_0, %c0_i32_1 : i32, i32, i32, i32
  }
  func.func @transform_1(%arg0: i32, %arg1: i32) -> (i32, i32, i32) {
    %c0_i32 = arith.constant 0 : i32
    %c0_i32_0 = arith.constant 0 : i32
    %c0_i32_1 = arith.constant 0 : i32
    return %c0_i32, %c0_i32_0, %arg1 : i32, i32, i32
  }
  func.func @transform_2(%arg0: i32, %arg1: i32) -> (i32, i32, i32, i32) {
    %c0_i32 = arith.constant 0 : i32
    %c0_i32_0 = arith.constant 0 : i32
    %c0_i32_1 = arith.constant 0 : i32
    return %arg0, %c0_i32, %c0_i32_0, %arg1 : i32, i32, i32, i32
  }
}

</mosaic_0001>

<llo_original>
// kernel: tpu_custom_call.1
$region0: #{tpu_custom_call.1}
  #allocation0 [shape = 'u32[]', space=smem, size = 0x4, offset = 0x4, fixed_abs, tag = 'smem constant byte address 0x4 - core index']
  #allocation1 [shape = 'u32[72,128]{1,0:T(1,128)}', space=vmem, size = 0x9000, scoped, tag = 'internal scratch']
  %s0 = inlined_call_operand.vmem [shape: f32[2,10,10,8], index: 0, kind: input, shape index: {}]
  %s1 = inlined_call_operand.vmem [shape: bf16[4,32,4], index: 1, kind: input, shape index: {}]
  %s2 = inlined_call_operand.vmem [shape: f32[2,4,64,4], index: 2, kind: output, shape index: {}]
  %s3 = sld [smem:[#allocation0]]
  $region41: #{tpu_custom_call.1} parent=0
    _
  %s5 = ssub.s32 1, %s3
  %s6 = scalar_select 0, %s5, %s3
  loop: start=0, step=1, limit=4
  $region2: #{tpu_custom_call.1} parent=0 // loop_pre_header
    _
  $region3: #{tpu_custom_call.1} parent=0 // loop_header
    %s8 = sphi 0, %s12
    %p9 = scmp.ge.s32.totalorder %s8, 4
    %s15 = sphi 0, %s27
    %s16 = sphi 0, %s23
    %s17 = sphi 0, %s15
    %s18 = sphi 0, %s16
    %s19 = sphi 0, %s17
    %s20 = sphi 0, %s18
    %s30 = sphi 0, %s32
    %s33 = sphi 0, %s30
    %s34 = sphi 0, %s33
    %s50 = sphi 0, %s34
    %s56 = sphi 0, %s58
    %s59 = sphi 0, %s56
    %s60 = sphi 0, %s59
    %s76 = sphi 0, %s60
    %s84 = sphi 0, %s86
    %s87 = sphi 0, %s84
    %s88 = sphi 0, %s87
    %s104 = sphi 0, %s88
  $region4: #{tpu_custom_call.1} parent=0 // loop_header_branch
    %11 = sbr.rel (%p9) target = $region8
  $region5: #{tpu_custom_call.1} parent=0 // loop_body
    %s13 = ssub.s32 %s8, 1
    %s14 = ssub.s32 %s8, 2
    %s21 = sadd.s32 1, %s16
    %p22 = scmp.ge.s32.totalorder %s21, 1
    %s23 = scalar_select %p22, 0, %s21
    %s24 = sadd.s32 1, %s15
    %s25 = scalar_select %p22, %s24, %s15
    %p26 = scmp.ge.s32.totalorder %s25, 2
    %s27 = scalar_select %p26, 0, %s25
    %s28 = ssub.s32 %s15, %s27
    %p29 = scmp.eq.s32.totalorder %s28, 0
    %s31 = sadd.s32 %s30, 1
    %s32 = scalar_select %p29, %s30, %s31
    %p35 = pneg %p29
    %p36 = scmp.eq.s32.totalorder %s8, 1
    %p37 = por %p35, %p36
    %p38 = scmp.ne.s32.totalorder %s30, %s33
    %p39 = scmp.eq.s32.totalorder %s8, 0
    %p40 = por %p38, %p39
    %p41 = scmp.ne.s32.totalorder %s30, %s33
    %p42 = scmp.eq.s32.totalorder %s13, 1
    %p43 = por %p41, %p42
    %p44 = scmp.ne.s32.totalorder %s33, %s34
    %p45 = scmp.eq.s32.totalorder %s13, 0
    %p46 = por %p44, %p45
    %p47 = scmp.ne.s32.totalorder %s33, %s34
    %p48 = scmp.eq.s32.totalorder %s14, 1
    %p49 = por %p47, %p48
    %p51 = scmp.ne.s32.totalorder %s34, %s50
    %p52 = scmp.eq.s32.totalorder %s14, 0
    %p53 = por %p51, %p52
    %s54 = ssub.s32 %s16, %s23
    %p55 = scmp.eq.s32.totalorder %s54, 0
    %s57 = sadd.s32 %s56, 1
    %s58 = scalar_select %p55, %s56, %s57
    %p61 = pneg %p55
    %p62 = scmp.eq.s32.totalorder %s8, 1
    %p63 = por %p61, %p62
    %p64 = scmp.ne.s32.totalorder %s56, %s59
    %p65 = scmp.eq.s32.totalorder %s8, 0
    %p66 = por %p64, %p65
    %p67 = scmp.ne.s32.totalorder %s56, %s59
    %p68 = scmp.eq.s32.totalorder %s13, 1
    %p69 = por %p67, %p68
    %p70 = scmp.ne.s32.totalorder %s59, %s60
    %p71 = scmp.eq.s32.totalorder %s13, 0
    %p72 = por %p70, %p71
    %p73 = scmp.ne.s32.totalorder %s59, %s60
    %p74 = scmp.eq.s32.totalorder %s14, 1
    %p75 = por %p73, %p74
    %p77 = scmp.ne.s32.totalorder %s60, %s76
    %p78 = scmp.eq.s32.totalorder %s14, 0
    %p79 = por %p77, %p78
    %s80 = ssub.s32 %s15, %s27
    %s81 = ssub.s32 %s16, %s23
    %s82 = sor.u32 %s80, %s81
    %p83 = scmp.eq.s32.totalorder %s82, 0
    %s85 = sadd.s32 %s84, 1
    %s86 = scalar_select %p83, %s84, %s85
    %p89 = pneg %p83
    %p90 = scmp.eq.s32.totalorder %s8, 1
    %p91 = por %p89, %p90
    %p92 = scmp.ne.s32.totalorder %s84, %s87
    %p93 = scmp.eq.s32.totalorder %s8, 0
    %p94 = por %p92, %p93
    %p95 = scmp.ne.s32.totalorder %s84, %s87
    %p96 = scmp.eq.s32.totalorder %s13, 1
    %p97 = por %p95, %p96
    %p98 = scmp.ne.s32.totalorder %s87, %s88
    %p99 = scmp.eq.s32.totalorder %s13, 0
    %p100 = por %p98, %p99
    %p101 = scmp.ne.s32.totalorder %s87, %s88
    %p102 = scmp.eq.s32.totalorder %s14, 1
    %p103 = por %p101, %p102
    %p105 = scmp.ne.s32.totalorder %s88, %s104
    %p106 = scmp.eq.s32.totalorder %s14, 0
    %p107 = por %p105, %p106
    %p108 = scmp.le.s32.totalorder 1, %s8
    %p109 = scmp.lt.s32.totalorder %s8, 3
    %p110 = pnand %p108, %p109
    %p111 = pneg %p110
    // Predicated region
    $region9: #{tpu_custom_call.1} parent=5 // pred_check
      _
    $region10: #{tpu_custom_call.1} parent=5 // pred_check_branch
      %113 = sbr.rel (%p110) target = $region12
    $region11: #{tpu_custom_call.1} parent=5 // pred_region
      %s114 = ssub.s32 %s8, 1
      // Predicated region
      $region13: #{tpu_custom_call.1} parent=11 // pred_check
        %p115 = pneg %p72
      $region14: #{tpu_custom_call.1} parent=11 // pred_check_branch
        %117 = sbr.rel (%p115) target = $region16
      $region15: #{tpu_custom_call.1} parent=11 // pred_region
        %p118 = scmp.lt.s32.totalorder %s18, 0
        %s119 = scalar_select %p118, %s18, 0
        %s120 = smul.addr %s119, 4
        %s121 = scalar_lea.vmem %s1, %s120
      $region16: #{tpu_custom_call.1} parent=11 // pred_fallthru
        _
    $region12: #{tpu_custom_call.1} parent=5 // pred_fallthru
      _
    %p122 = scmp.lt.s32.totalorder %s8, 2
    // Predicated region
    $region17: #{tpu_custom_call.1} parent=5 // pred_check
      %p123 = pneg %p122
    $region18: #{tpu_custom_call.1} parent=5 // pred_check_branch
      %125 = sbr.rel (%p123) target = $region20
    $region19: #{tpu_custom_call.1} parent=5 // pred_region
      // Predicated region
      $region21: #{tpu_custom_call.1} parent=19 // pred_check
        %p126 = pneg %p40
      $region22: #{tpu_custom_call.1} parent=19 // pred_check_branch
        %128 = sbr.rel (%p126) target = $region24
      $region23: #{tpu_custom_call.1} parent=19 // pred_region
        %p129 = scmp.lt.s32.totalorder %s15, 1
        %s130 = scalar_select %p129, %s15, 1
        %s131 = smul.addr %s130, 20
        %s132 = smul.addr %s131, 8
        %s133 = scalar_lea.vmem %s0, %s132
      $region24: #{tpu_custom_call.1} parent=19 // pred_fallthru
        _
    $region20: #{tpu_custom_call.1} parent=5 // pred_fallthru
      _
    %p134 = scmp.le.s32.totalorder 1, %s8
    %p135 = scmp.lt.s32.totalorder %s8, 3
    %p136 = pnand %p134, %p135
    %p137 = pneg %p136
    // Predicated region
    $region25: #{tpu_custom_call.1} parent=5 // pred_check
      _
    $region26: #{tpu_custom_call.1} parent=5 // pred_check_branch
      %139 = sbr.rel (%p136) target = $region28
    $region27: #{tpu_custom_call.1} parent=5 // pred_region
      %s140 = ssub.s32 %s8, 1
      %p141 = scmp.lt.s32.totalorder %s17, 1
      %s142 = scalar_select %p141, %s17, 1
      %s143 = smul.addr %s142, 20
      %s144 = smul.addr %s143, 8
      %s145 = scalar_lea.vmem %s0, %s144
      %p146 = pneg %p46
      %p147 = pneg %p43
      %p148 = scmp.lt.s32.totalorder %s18, 0
      %s149 = scalar_select %p148, %s18, 0
      %s150 = smul.addr %s149, 4
      %s151 = scalar_lea.vmem %s1, %s150
      %p152 = pneg %p72
      %p153 = pneg %p69
      %p154 = pneg %p100
      %p155 = pneg %p97
      %p156 = scmp.lt.s32.totalorder %s17, 1
      %s157 = scalar_select %p156, %s17, 1
      %p158 = scmp.lt.s32.totalorder %s18, 0
      %s159 = scalar_select %p158, %s18, 0
      %s160 = smul.addr %s157, 32
      %s161 = sadd.s32 %s159, %s160
      %s162 = smul.addr %s161, 8
      %s163 = scalar_lea.vmem %s2, %s162
      %p164 = scmp.lt.s32.totalorder %s17, 1
      %s165 = scalar_select %p164, %s17, 1
      %s166 = smul.addr %s165, 20
      %s167 = smul.addr %s166, 8
      %s168 = scalar_lea.vmem %s0, %s167
      %p169 = scmp.lt.s32.totalorder %s18, 0
      %s170 = scalar_select %p169, %s18, 0
      %s171 = smul.addr %s170, 4
      %s172 = scalar_lea.vmem %s1, %s171
      %p173 = scmp.lt.s32.totalorder %s17, 1
      %s174 = scalar_select %p173, %s17, 1
      %p175 = scmp.lt.s32.totalorder %s18, 0
      %s176 = scalar_select %p175, %s18, 0
      %s177 = smul.addr %s174, 32
      %s178 = sadd.s32 %s176, %s177
      %s179 = smul.addr %s178, 8
      %s180 = scalar_lea.vmem %s2, %s179
      %v182 = vld [vmem:[%s168] sm:$0xff]
      %v183 = vld [vmem:[%s168 + $0x8] sm:$0x3]
      %v184 = vld [vmem:[%s168 + $0x10] sm:$0xff]
      %v185 = vld [vmem:[%s168 + $0x18] sm:$0x3]
      %v186 = vld [vmem:[%s168 + $0x20] sm:$0xff]
      %v187 = vld [vmem:[%s168 + $0x28] sm:$0x3]
      %v188 = vld [vmem:[%s168 + $0x30] sm:$0xff]
      %v189 = vld [vmem:[%s168 + $0x38] sm:$0x3]
      %v190 = vld [vmem:[%s168 + $0x40] sm:$0xff]
      %v191 = vld [vmem:[%s168 + $0x48] sm:$0x3]
      %v192 = vld [vmem:[%s168 + $0x50] sm:$0xff]
      %v193 = vld [vmem:[%s168 + $0x58] sm:$0x3]
      %v194 = vld [vmem:[%s168 + $0x60] sm:$0xff]
      %v195 = vld [vmem:[%s168 + $0x68] sm:$0x3]
      %v196 = vld [vmem:[%s168 + $0x70] sm:$0xff]
      %v197 = vld [vmem:[%s168 + $0x78] sm:$0x3]
      %v198 = vld [vmem:[%s168 + $0x80] sm:$0xff]
      %v199 = vld [vmem:[%s168 + $0x88] sm:$0x3]
      %v200 = vld [vmem:[%s168 + $0x90] sm:$0xff]
      %v201 = vld [vmem:[%s168 + $0x98] sm:$0x3]
      %vm218 = vcmask 1046528
      %v219 = vrot.slane %v182, 1
      %v220 = vrot.slane %v183, 1
      %v221 = vsel %vm218, %v219, %v220
      %v222 = vrot.slane %v184, 1
      %v223 = vrot.slane %v185, 1
      %v224 = vsel %vm218, %v222, %v223
      %v225 = vrot.slane %v186, 1
      %v226 = vrot.slane %v187, 1
      %v227 = vsel %vm218, %v225, %v226
      %v228 = vrot.slane %v188, 1
      %v229 = vrot.slane %v189, 1
      %v230 = vsel %vm218, %v228, %v229
      %v231 = vrot.slane %v190, 1
      %v232 = vrot.slane %v191, 1
      %v233 = vsel %vm218, %v231, %v232
      %v234 = vrot.slane %v192, 1
      %v235 = vrot.slane %v193, 1
      %v236 = vsel %vm218, %v234, %v235
      %v237 = vrot.slane %v194, 1
      %v238 = vrot.slane %v195, 1
      %v239 = vsel %vm218, %v237, %v238
      %v240 = vrot.slane %v196, 1
      %v241 = vrot.slane %v197, 1
      %v242 = vsel %vm218, %v240, %v241
      %vm251 = vcmask 1045504
      %v252 = vrot.slane %v182, 2
      %v253 = vrot.slane %v183, 2
      %v254 = vsel %vm251, %v252, %v253
      %v255 = vrot.slane %v184, 2
      %v256 = vrot.slane %v185, 2
      %v257 = vsel %vm251, %v255, %v256
      %v258 = vrot.slane %v186, 2
      %v259 = vrot.slane %v187, 2
      %v260 = vsel %vm251, %v258, %v259
      %v261 = vrot.slane %v188, 2
      %v262 = vrot.slane %v189, 2
      %v263 = vsel %vm251, %v261, %v262
      %v264 = vrot.slane %v190, 2
      %v265 = vrot.slane %v191, 2
      %v266 = vsel %vm251, %v264, %v265
      %v267 = vrot.slane %v192, 2
      %v268 = vrot.slane %v193, 2
      %v269 = vsel %vm251, %v267, %v268
      %v270 = vrot.slane %v194, 2
      %v271 = vrot.slane %v195, 2
      %v272 = vsel %vm251, %v270, %v271
      %v273 = vrot.slane %v196, 2
      %v274 = vrot.slane %v197, 2
      %v275 = vsel %vm251, %v273, %v274
      %v278 = vrot.slane %v198, 1
      %v279 = vrot.slane %v199, 1
      %v280 = vsel %vm218, %v278, %v279
      %v282 = vrot.slane %v198, 2
      %v283 = vrot.slane %v199, 2
      %v284 = vsel %vm251, %v282, %v283
      %v287 = vrot.slane %v200, 1
      %v288 = vrot.slane %v201, 1
      %v289 = vsel %vm218, %v287, %v288
      %v290 = vrot.slane %v200, 2
      %v291 = vrot.slane %v201, 2
      %v292 = vsel %vm251, %v290, %v291
      %293 = vrot.lane.b32.xlu0 %v221, 8
      %v294 = vpop.permute.xlu0 %293
      %295 = vrot.lane.b32.xlu0 %v224, 8
      %v296 = vpop.permute.xlu0 %295
      %297 = vrot.lane.b32.xlu0 %v227, 8
      %v298 = vpop.permute.xlu0 %297
      %299 = vrot.lane.b32.xlu0 %v230, 8
      %v300 = vpop.permute.xlu0 %299
      %301 = vrot.lane.b32.xlu0 %v233, 8
      %v302 = vpop.permute.xlu0 %301
      %303 = vrot.lane.b32.xlu0 %v236, 8
      %v304 = vpop.permute.xlu0 %303
      %305 = vrot.lane.b32.xlu0 %v239, 8
      %v306 = vpop.permute.xlu0 %305
      %307 = vrot.lane.b32.xlu0 %v242, 8
      %v308 = vpop.permute.xlu0 %307
      %317 = vrot.lane.b32.xlu0 %v184, 16
      %v318 = vpop.permute.xlu0 %317
      %319 = vrot.lane.b32.xlu0 %v186, 16
      %v320 = vpop.permute.xlu0 %319
      %321 = vrot.lane.b32.xlu0 %v188, 16
      %v322 = vpop.permute.xlu0 %321
      %323 = vrot.lane.b32.xlu0 %v190, 16
      %v324 = vpop.permute.xlu0 %323
      %325 = vrot.lane.b32.xlu0 %v192, 16
      %v326 = vpop.permute.xlu0 %325
      %327 = vrot.lane.b32.xlu0 %v194, 16
      %v328 = vpop.permute.xlu0 %327
      %329 = vrot.lane.b32.xlu0 %v196, 16
      %v330 = vpop.permute.xlu0 %329
      %331 = vrot.lane.b32.xlu0 %v198, 16
      %v332 = vpop.permute.xlu0 %331
      %341 = vrot.lane.b32.xlu0 %v224, 24
      %v342 = vpop.permute.xlu0 %341
      %343 = vrot.lane.b32.xlu0 %v227, 24
      %v344 = vpop.permute.xlu0 %343
      %345 = vrot.lane.b32.xlu0 %v230, 24
      %v346 = vpop.permute.xlu0 %345
      %347 = vrot.lane.b32.xlu0 %v233, 24
      %v348 = vpop.permute.xlu0 %347
      %349 = vrot.lane.b32.xlu0 %v236, 24
      %v350 = vpop.permute.xlu0 %349
      %351 = vrot.lane.b32.xlu0 %v239, 24
      %v352 = vpop.permute.xlu0 %351
      %353 = vrot.lane.b32.xlu0 %v242, 24
      %v354 = vpop.permute.xlu0 %353
      %355 = vrot.lane.b32.xlu0 %v280, 24
      %v356 = vpop.permute.xlu0 %355
      %vm365 = vcmask 64512
      %v366 = vsel %vm365, %v182, %v294
      %v367 = vsel %vm365, %v184, %v296
      %v368 = vsel %vm365, %v186, %v298
      %v369 = vsel %vm365, %v188, %v300
      %v370 = vsel %vm365, %v190, %v302
      %v371 = vsel %vm365, %v192, %v304
      %v372 = vsel %vm365, %v194, %v306
      %v373 = vsel %vm365, %v196, %v308
      %vm374 = vcmask 130048
      %v375 = vsel %vm374, %v366, %v318
      %v376 = vsel %vm374, %v367, %v320
      %v377 = vsel %vm374, %v368, %v322
      %v378 = vsel %vm374, %v369, %v324
      %v379 = vsel %vm374, %v370, %v326
      %v380 = vsel %vm374, %v371, %v328
      %v381 = vsel %vm374, %v372, %v330
      %v382 = vsel %vm374, %v373, %v332
      %vm383 = vcmask 195584
      %v384 = vsel %vm383, %v375, %v342
      %v385 = vsel %vm383, %v376, %v344
      %v386 = vsel %vm383, %v377, %v346
      %v387 = vsel %vm383, %v378, %v348
      %v388 = vsel %vm383, %v379, %v350
      %v389 = vsel %vm383, %v380, %v352
      %v390 = vsel %vm383, %v381, %v354
      %v391 = vsel %vm383, %v382, %v356
      %v392 = vpack.c.bf16 %v385, %v384
      %v393 = vpack.c.bf16 %v387, %v386
      %v394 = vpack.c.bf16 %v389, %v388
      %v395 = vpack.c.bf16 %v391, %v390
      %v396 = vld [vmem:[%s172] sm:$0xf]
      %v397 = vld [vmem:[%s172 + $0x4] sm:$0xf]
      %v398 = vld [vmem:[%s172 + $0x8] sm:$0xf]
      %v399 = vld [vmem:[%s172 + $0xc] sm:$0xf]
      %v404 = vunpack.c.l.b16 %v396
      %v405 = vunpack.c.l.b16 %v397
      %v406 = vunpack.c.l.b16 %v398
      %v407 = vunpack.c.l.b16 %v399
      %v408 = vpack.c.b16 %v405, %v404
      %v409 = vpack.c.b16 %v407, %v406
      %vm412 = vcmask 261120
      %v414 = vsel %vm412, %v392, 0
      %v417 = vsel %vm412, %v393, 0
      %v420 = vsel %vm412, %v394, 0
      %v423 = vsel %vm412, %v395, 0
      %425 = vmatpush.bf16.msra.mxu0 0
      %426 = vmatpush.bf16.msra.mxu0 0
      %427 = vmatpush.bf16.msra.mxu0 0
      %428 = vmatpush.bf16.msra.mxu0 0
      %429 = vmatpush.bf16.msra.mxu0 0
      %430 = vmatpush.bf16.msra.mxu0 0
      %431 = vmatpush.bf16.msra.mxu0 %v409
      %432 = vmatpush.bf16.msra.mxu0 %v408
      %433 = vmatmul.bf16.gmra.mxu0 %v414
      %v434 = vpop.f32.mrf.mxu0
      %v435 = vadd.f32 0.0, %v434
      %v436 = vpop.f32.mrf.mxu0
      %v437 = vadd.f32 0.0, %v436
      %438 = vmatmul.bf16.gmra.mxu0 %v417
      %v439 = vpop.f32.mrf.mxu0
      %v440 = vadd.f32 0.0, %v439
      %v441 = vpop.f32.mrf.mxu0
      %v442 = vadd.f32 0.0, %v441
      %443 = vmatmul.bf16.gmra.mxu0 %v420
      %v444 = vpop.f32.mrf.mxu0
      %v445 = vadd.f32 0.0, %v444
      %v446 = vpop.f32.mrf.mxu0
      %v447 = vadd.f32 0.0, %v446
      %448 = vmatmul.bf16.gmra.mxu0 %v423
      %v449 = vpop.f32.mrf.mxu0
      %v450 = vadd.f32 0.0, %v449
      %v451 = vpop.f32.mrf.mxu0
      %v452 = vadd.f32 0.0, %v451
      %453 = vdwg.mxu0
      %454 = vrot.lane.b32.xlu0 %v254, 8
      %v455 = vpop.permute.xlu0 %454
      %456 = vrot.lane.b32.xlu0 %v257, 8
      %v457 = vpop.permute.xlu0 %456
      %458 = vrot.lane.b32.xlu0 %v260, 8
      %v459 = vpop.permute.xlu0 %458
      %460 = vrot.lane.b32.xlu0 %v263, 8
      %v461 = vpop.permute.xlu0 %460
      %462 = vrot.lane.b32.xlu0 %v266, 8
      %v463 = vpop.permute.xlu0 %462
      %464 = vrot.lane.b32.xlu0 %v269, 8
      %v465 = vpop.permute.xlu0 %464
      %466 = vrot.lane.b32.xlu0 %v272, 8
      %v467 = vpop.permute.xlu0 %466
      %468 = vrot.lane.b32.xlu0 %v275, 8
      %v469 = vpop.permute.xlu0 %468
      %478 = vrot.lane.b32.xlu0 %v224, 16
      %v479 = vpop.permute.xlu0 %478
      %480 = vrot.lane.b32.xlu0 %v227, 16
      %v481 = vpop.permute.xlu0 %480
      %482 = vrot.lane.b32.xlu0 %v230, 16
      %v483 = vpop.permute.xlu0 %482
      %484 = vrot.lane.b32.xlu0 %v233, 16
      %v485 = vpop.permute.xlu0 %484
      %486 = vrot.lane.b32.xlu0 %v236, 16
      %v487 = vpop.permute.xlu0 %486
      %488 = vrot.lane.b32.xlu0 %v239, 16
      %v489 = vpop.permute.xlu0 %488
      %490 = vrot.lane.b32.xlu0 %v242, 16
      %v491 = vpop.permute.xlu0 %490
      %492 = vrot.lane.b32.xlu0 %v280, 16
      %v493 = vpop.permute.xlu0 %492
      %502 = vrot.lane.b32.xlu0 %v257, 24
      %v503 = vpop.permute.xlu0 %502
      %504 = vrot.lane.b32.xlu0 %v260, 24
      %v505 = vpop.permute.xlu0 %504
      %506 = vrot.lane.b32.xlu0 %v263, 24
      %v507 = vpop.permute.xlu0 %506
      %508 = vrot.lane.b32.xlu0 %v266, 24
      %v509 = vpop.permute.xlu0 %508
      %510 = vrot.lane.b32.xlu0 %v269, 24
      %v511 = vpop.permute.xlu0 %510
      %512 = vrot.lane.b32.xlu0 %v272, 24
      %v513 = vpop.permute.xlu0 %512
      %514 = vrot.lane.b32.xlu0 %v275, 24
      %v515 = vpop.permute.xlu0 %514
      %516 = vrot.lane.b32.xlu0 %v284, 24
      %v517 = vpop.permute.xlu0 %516
      %v526 = vsel %vm365, %v221, %v455
      %v527 = vsel %vm365, %v224, %v457
      %v528 = vsel %vm365, %v227, %v459
      %v529 = vsel %vm365, %v230, %v461
      %v530 = vsel %vm365, %v233, %v463
      %v531 = vsel %vm365, %v236, %v465
      %v532 = vsel %vm365, %v239, %v467
      %v533 = vsel %vm365, %v242, %v469
      %v534 = vsel %vm374, %v526, %v479
      %v535 = vsel %vm374, %v527, %v481
      %v536 = vsel %vm374, %v528, %v483
      %v537 = vsel %vm374, %v529, %v485
      %v538 = vsel %vm374, %v530, %v487
      %v539 = vsel %vm374, %v531, %v489
      %v540 = vsel %vm374, %v532, %v491
      %v541 = vsel %vm374, %v533, %v493
      %v542 = vsel %vm383, %v534, %v503
      %v543 = vsel %vm383, %v535, %v505
      %v544 = vsel %vm383, %v536, %v507
      %v545 = vsel %vm383, %v537, %v509
      %v546 = vsel %vm383, %v538, %v511
      %v547 = vsel %vm383, %v539, %v513
      %v548 = vsel %vm383, %v540, %v515
      %v549 = vsel %vm383, %v541, %v517
      %v550 = vpack.c.bf16 %v543, %v542
      %v551 = vpack.c.bf16 %v545, %v544
      %v552 = vpack.c.bf16 %v547, %v546
      %v553 = vpack.c.bf16 %v549, %v548
      %s554 = scalar_lea.vmem %s172, 16
      %v555 = vld [vmem:[%s554] sm:$0xf]
      %v556 = vld [vmem:[%s554 + $0x4] sm:$0xf]
      %v557 = vld [vmem:[%s554 + $0x8] sm:$0xf]
      %v558 = vld [vmem:[%s554 + $0xc] sm:$0xf]
      %v563 = vunpack.c.l.b16 %v555
      %v564 = vunpack.c.l.b16 %v556
      %v565 = vunpack.c.l.b16 %v557
      %v566 = vunpack.c.l.b16 %v558
      %v567 = vpack.c.b16 %v564, %v563
      %v568 = vpack.c.b16 %v566, %v565
      %v572 = vsel %vm412, %v550, 0
      %v575 = vsel %vm412, %v551, 0
      %v578 = vsel %vm412, %v552, 0
      %v581 = vsel %vm412, %v553, 0
      %583 = vmatpush.bf16.msra.mxu0 0
      %584 = vmatpush.bf16.msra.mxu0 0
      %585 = vmatpush.bf16.msra.mxu0 0
      %586 = vmatpush.bf16.msra.mxu0 0
      %587 = vmatpush.bf16.msra.mxu0 0
      %588 = vmatpush.bf16.msra.mxu0 0
      %589 = vmatpush.bf16.msra.mxu0 %v568
      %590 = vmatpush.bf16.msra.mxu0 %v567
      %591 = vmatmul.bf16.gmra.mxu0 %v572
      %v592 = vpop.f32.mrf.mxu0
      %v593 = vadd.f32 0.0, %v592
      %v594 = vpop.f32.mrf.mxu0
      %v595 = vadd.f32 0.0, %v594
      %596 = vmatmul.bf16.gmra.mxu0 %v575
      %v597 = vpop.f32.mrf.mxu0
      %v598 = vadd.f32 0.0, %v597
      %v599 = vpop.f32.mrf.mxu0
      %v600 = vadd.f32 0.0, %v599
      %601 = vmatmul.bf16.gmra.mxu0 %v578
      %v602 = vpop.f32.mrf.mxu0
      %v603 = vadd.f32 0.0, %v602
      %v604 = vpop.f32.mrf.mxu0
      %v605 = vadd.f32 0.0, %v604
      %606 = vmatmul.bf16.gmra.mxu0 %v581
      %v607 = vpop.f32.mrf.mxu0
      %v608 = vadd.f32 0.0, %v607
      %v609 = vpop.f32.mrf.mxu0
      %v610 = vadd.f32 0.0, %v609
      %611 = vdwg.mxu0
      %612 = vrot.lane.b32.xlu0 %v280, 8
      %v613 = vpop.permute.xlu0 %612
      %615 = vrot.lane.b32.xlu0 %v200, 16
      %v616 = vpop.permute.xlu0 %615
      %618 = vrot.lane.b32.xlu0 %v289, 24
      %v619 = vpop.permute.xlu0 %618
      %v621 = vsel %vm365, %v198, %v613
      %v622 = vsel %vm374, %v621, %v616
      %v623 = vsel %vm383, %v622, %v619
      %v624 = vpack.c.bf16 %v386, %v385
      %v625 = vpack.c.bf16 %v388, %v387
      %v626 = vpack.c.bf16 %v390, %v389
      %v627 = vpack.c.bf16 %v623, %v391
      %s628 = scalar_lea.vmem %s172, 32
      %v629 = vld [vmem:[%s628] sm:$0xf]
      %v630 = vld [vmem:[%s628 + $0x4] sm:$0xf]
      %v631 = vld [vmem:[%s628 + $0x8] sm:$0xf]
      %v632 = vld [vmem:[%s628 + $0xc] sm:$0xf]
      %v637 = vunpack.c.l.b16 %v629
      %v638 = vunpack.c.l.b16 %v630
      %v639 = vunpack.c.l.b16 %v631
      %v640 = vunpack.c.l.b16 %v632
      %v641 = vpack.c.b16 %v638, %v637
      %v642 = vpack.c.b16 %v640, %v639
      %v646 = vsel %vm412, %v624, 0
      %v649 = vsel %vm412, %v625, 0
      %v652 = vsel %vm412, %v626, 0
      %v655 = vsel %vm412, %v627, 0
      %657 = vmatpush.bf16.msra.mxu0 0
      %658 = vmatpush.bf16.msra.mxu0 0
      %659 = vmatpush.bf16.msra.mxu0 0
      %660 = vmatpush.bf16.msra.mxu0 0
      %661 = vmatpush.bf16.msra.mxu0 0
      %662 = vmatpush.bf16.msra.mxu0 0
      %663 = vmatpush.bf16.msra.mxu0 %v642
      %664 = vmatpush.bf16.msra.mxu0 %v641
      %665 = vmatmul.bf16.gmra.mxu0 %v646
      %v666 = vpop.f32.mrf.mxu0
      %v667 = vadd.f32 0.0, %v666
      %v668 = vpop.f32.mrf.mxu0
      %v669 = vadd.f32 0.0, %v668
      %670 = vmatmul.bf16.gmra.mxu0 %v649
      %v671 = vpop.f32.mrf.mxu0
      %v672 = vadd.f32 0.0, %v671
      %v673 = vpop.f32.mrf.mxu0
      %v674 = vadd.f32 0.0, %v673
      %675 = vmatmul.bf16.gmra.mxu0 %v652
      %v676 = vpop.f32.mrf.mxu0
      %v677 = vadd.f32 0.0, %v676
      %v678 = vpop.f32.mrf.mxu0
      %v679 = vadd.f32 0.0, %v678
      %680 = vmatmul.bf16.gmra.mxu0 %v655
      %v681 = vpop.f32.mrf.mxu0
      %v682 = vadd.f32 0.0, %v681
      %v683 = vpop.f32.mrf.mxu0
      %v684 = vadd.f32 0.0, %v683
      %685 = vdwg.mxu0
      %686 = vrot.lane.b32.xlu0 %v284, 8
      %v687 = vpop.permute.xlu0 %686
      %689 = vrot.lane.b32.xlu0 %v289, 16
      %v690 = vpop.permute.xlu0 %689
      %692 = vrot.lane.b32.xlu0 %v292, 24
      %v693 = vpop.permute.xlu0 %692
      %v695 = vsel %vm365, %v280, %v687
      %v696 = vsel %vm374, %v695, %v690
      %v697 = vsel %vm383, %v696, %v693
      %v698 = vpack.c.bf16 %v544, %v543
      %v699 = vpack.c.bf16 %v546, %v545
      %v700 = vpack.c.bf16 %v548, %v547
      %v701 = vpack.c.bf16 %v697, %v549
      %s702 = scalar_lea.vmem %s172, 48
      %v703 = vld [vmem:[%s702] sm:$0xf]
      %v704 = vld [vmem:[%s702 + $0x4] sm:$0xf]
      %v705 = vld [vmem:[%s702 + $0x8] sm:$0xf]
      %v706 = vld [vmem:[%s702 + $0xc] sm:$0xf]
      %v711 = vunpack.c.l.b16 %v703
      %v712 = vunpack.c.l.b16 %v704
      %v713 = vunpack.c.l.b16 %v705
      %v714 = vunpack.c.l.b16 %v706
      %v715 = vpack.c.b16 %v712, %v711
      %v716 = vpack.c.b16 %v714, %v713
      %v720 = vsel %vm412, %v698, 0
      %v723 = vsel %vm412, %v699, 0
      %v726 = vsel %vm412, %v700, 0
      %v729 = vsel %vm412, %v701, 0
      %731 = vmatpush.bf16.msra.mxu0 0
      %732 = vmatpush.bf16.msra.mxu0 0
      %733 = vmatpush.bf16.msra.mxu0 0
      %734 = vmatpush.bf16.msra.mxu0 0
      %735 = vmatpush.bf16.msra.mxu0 0
      %736 = vmatpush.bf16.msra.mxu0 0
      %737 = vmatpush.bf16.msra.mxu0 %v716
      %738 = vmatpush.bf16.msra.mxu0 %v715
      %739 = vmatmul.bf16.gmra.mxu0 %v720
      %v740 = vpop.f32.mrf.mxu0
      %v741 = vadd.f32 0.0, %v740
      %v742 = vpop.f32.mrf.mxu0
      %v743 = vadd.f32 0.0, %v742
      %744 = vmatmul.bf16.gmra.mxu0 %v723
      %v745 = vpop.f32.mrf.mxu0
      %v746 = vadd.f32 0.0, %v745
      %v747 = vpop.f32.mrf.mxu0
      %v748 = vadd.f32 0.0, %v747
      %749 = vmatmul.bf16.gmra.mxu0 %v726
      %v750 = vpop.f32.mrf.mxu0
      %v751 = vadd.f32 0.0, %v750
      %v752 = vpop.f32.mrf.mxu0
      %v753 = vadd.f32 0.0, %v752
      %754 = vmatmul.bf16.gmra.mxu0 %v729
      %v755 = vpop.f32.mrf.mxu0
      %v756 = vadd.f32 0.0, %v755
      %v757 = vpop.f32.mrf.mxu0
      %v758 = vadd.f32 0.0, %v757
      %759 = vdwg.mxu0
      %vm760 = vcmask 31744
      %v761 = vsel %vm760, %v435, 0.0
      %v762 = vsel %vm760, %v437, 0.0
      %v763 = vadd.f32 %v761, %v762
      %v764 = vsel %vm760, %v440, 0.0
      %v765 = vadd.f32 %v763, %v764
      %v766 = vsel %vm760, %v442, 0.0
      %v767 = vadd.f32 %v765, %v766
      %v768 = vsel %vm760, %v445, 0.0
      %v769 = vadd.f32 %v767, %v768
      %v770 = vsel %vm760, %v447, 0.0
      %v771 = vadd.f32 %v769, %v770
      %v772 = vsel %vm760, %v450, 0.0
      %v773 = vadd.f32 %v771, %v772
      %v774 = vsel %vm760, %v452, 0.0
      %v775 = vadd.f32 %v773, %v774
      %v776 = vrot.slane %v775, 4
      %v777 = vadd.f32 %v775, %v776
      %v778 = vrot.slane %v777, 2
      %v779 = vadd.f32 %v777, %v778
      %v780 = vrot.slane %v779, 1
      %v781 = vadd.f32 %v779, %v780
      %v782 = vadd.f32 %v781, 0.0
      %v783 = vmul.f32 %v435, %v435
      %v784 = vmul.f32 %v437, %v437
      %v785 = vmul.f32 %v440, %v440
      %v786 = vmul.f32 %v442, %v442
      %v787 = vmul.f32 %v445, %v445
      %v788 = vmul.f32 %v447, %v447
      %v789 = vmul.f32 %v450, %v450
      %v790 = vmul.f32 %v452, %v452
      %v791 = vsel %vm760, %v783, 0.0
      %v792 = vsel %vm760, %v784, 0.0
      %v793 = vadd.f32 %v791, %v792
      %v794 = vsel %vm760, %v785, 0.0
      %v795 = vadd.f32 %v793, %v794
      %v796 = vsel %vm760, %v786, 0.0
      %v797 = vadd.f32 %v795, %v796
      %v798 = vsel %vm760, %v787, 0.0
      %v799 = vadd.f32 %v797, %v798
      %v800 = vsel %vm760, %v788, 0.0
      %v801 = vadd.f32 %v799, %v800
      %v802 = vsel %vm760, %v789, 0.0
      %v803 = vadd.f32 %v801, %v802
      %v804 = vsel %vm760, %v790, 0.0
      %v805 = vadd.f32 %v803, %v804
      %v806 = vrot.slane %v805, 4
      %v807 = vadd.f32 %v805, %v806
      %v808 = vrot.slane %v807, 2
      %v809 = vadd.f32 %v807, %v808
      %v810 = vrot.slane %v809, 1
      %v811 = vadd.f32 %v809, %v810
      %v812 = vadd.f32 %v811, 0.0
      %v813 = vsel %vm760, %v593, 0.0
      %v814 = vsel %vm760, %v595, 0.0
      %v815 = vadd.f32 %v813, %v814
      %v816 = vsel %vm760, %v598, 0.0
      %v817 = vadd.f32 %v815, %v816
      %v818 = vsel %vm760, %v600, 0.0
      %v819 = vadd.f32 %v817, %v818
      %v820 = vsel %vm760, %v603, 0.0
      %v821 = vadd.f32 %v819, %v820
      %v822 = vsel %vm760, %v605, 0.0
      %v823 = vadd.f32 %v821, %v822
      %v824 = vsel %vm760, %v608, 0.0
      %v825 = vadd.f32 %v823, %v824
      %v826 = vsel %vm760, %v610, 0.0
      %v827 = vadd.f32 %v825, %v826
      %v828 = vrot.slane %v827, 4
      %v829 = vadd.f32 %v827, %v828
      %v830 = vrot.slane %v829, 2
      %v831 = vadd.f32 %v829, %v830
      %v832 = vrot.slane %v831, 1
      %v833 = vadd.f32 %v831, %v832
      %v834 = vadd.f32 %v782, %v833
      %v835 = vmul.f32 %v593, %v593
      %v836 = vmul.f32 %v595, %v595
      %v837 = vmul.f32 %v598, %v598
      %v838 = vmul.f32 %v600, %v600
      %v839 = vmul.f32 %v603, %v603
      %v840 = vmul.f32 %v605, %v605
      %v841 = vmul.f32 %v608, %v608
      %v842 = vmul.f32 %v610, %v610
      %v843 = vsel %vm760, %v835, 0.0
      %v844 = vsel %vm760, %v836, 0.0
      %v845 = vadd.f32 %v843, %v844
      %v846 = vsel %vm760, %v837, 0.0
      %v847 = vadd.f32 %v845, %v846
      %v848 = vsel %vm760, %v838, 0.0
      %v849 = vadd.f32 %v847, %v848
      %v850 = vsel %vm760, %v839, 0.0
      %v851 = vadd.f32 %v849, %v850
      %v852 = vsel %vm760, %v840, 0.0
      %v853 = vadd.f32 %v851, %v852
      %v854 = vsel %vm760, %v841, 0.0
      %v855 = vadd.f32 %v853, %v854
      %v856 = vsel %vm760, %v842, 0.0
      %v857 = vadd.f32 %v855, %v856
      %v858 = vrot.slane %v857, 4
      %v859 = vadd.f32 %v857, %v858
      %v860 = vrot.slane %v859, 2
      %v861 = vadd.f32 %v859, %v860
      %v862 = vrot.slane %v861, 1
      %v863 = vadd.f32 %v861, %v862
      %v864 = vadd.f32 %v812, %v863
      %v865 = vsel %vm760, %v667, 0.0
      %v866 = vsel %vm760, %v669, 0.0
      %v867 = vadd.f32 %v865, %v866
      %v868 = vsel %vm760, %v672, 0.0
      %v869 = vadd.f32 %v867, %v868
      %v870 = vsel %vm760, %v674, 0.0
      %v871 = vadd.f32 %v869, %v870
      %v872 = vsel %vm760, %v677, 0.0
      %v873 = vadd.f32 %v871, %v872
      %v874 = vsel %vm760, %v679, 0.0
      %v875 = vadd.f32 %v873, %v874
      %v876 = vsel %vm760, %v682, 0.0
      %v877 = vadd.f32 %v875, %v876
      %v878 = vsel %vm760, %v684, 0.0
      %v879 = vadd.f32 %v877, %v878
      %v880 = vrot.slane %v879, 4
      %v881 = vadd.f32 %v879, %v880
      %v882 = vrot.slane %v881, 2
      %v883 = vadd.f32 %v881, %v882
      %v884 = vrot.slane %v883, 1
      %v885 = vadd.f32 %v883, %v884
      %v886 = vadd.f32 %v834, %v885
      %v887 = vmul.f32 %v667, %v667
      %v888 = vmul.f32 %v669, %v669
      %v889 = vmul.f32 %v672, %v672
      %v890 = vmul.f32 %v674, %v674
      %v891 = vmul.f32 %v677, %v677
      %v892 = vmul.f32 %v679, %v679
      %v893 = vmul.f32 %v682, %v682
      %v894 = vmul.f32 %v684, %v684
      %v895 = vsel %vm760, %v887, 0.0
      %v896 = vsel %vm760, %v888, 0.0
      %v897 = vadd.f32 %v895, %v896
      %v898 = vsel %vm760, %v889, 0.0
      %v899 = vadd.f32 %v897, %v898
      %v900 = vsel %vm760, %v890, 0.0
      %v901 = vadd.f32 %v899, %v900
      %v902 = vsel %vm760, %v891, 0.0
      %v903 = vadd.f32 %v901, %v902
      %v904 = vsel %vm760, %v892, 0.0
      %v905 = vadd.f32 %v903, %v904
      %v906 = vsel %vm760, %v893, 0.0
      %v907 = vadd.f32 %v905, %v906
      %v908 = vsel %vm760, %v894, 0.0
      %v909 = vadd.f32 %v907, %v908
      %v910 = vrot.slane %v909, 4
      %v911 = vadd.f32 %v909, %v910
      %v912 = vrot.slane %v911, 2
      %v913 = vadd.f32 %v911, %v912
      %v914 = vrot.slane %v913, 1
      %v915 = vadd.f32 %v913, %v914
      %v916 = vadd.f32 %v864, %v915
      %v917 = vsel %vm760, %v741, 0.0
      %v918 = vsel %vm760, %v743, 0.0
      %v919 = vadd.f32 %v917, %v918
      %v920 = vsel %vm760, %v746, 0.0
      %v921 = vadd.f32 %v919, %v920
      %v922 = vsel %vm760, %v748, 0.0
      %v923 = vadd.f32 %v921, %v922
      %v924 = vsel %vm760, %v751, 0.0
      %v925 = vadd.f32 %v923, %v924
      %v926 = vsel %vm760, %v753, 0.0
      %v927 = vadd.f32 %v925, %v926
      %v928 = vsel %vm760, %v756, 0.0
      %v929 = vadd.f32 %v927, %v928
      %v930 = vsel %vm760, %v758, 0.0
      %v931 = vadd.f32 %v929, %v930
      %v932 = vrot.slane %v931, 4
      %v933 = vadd.f32 %v931, %v932
      %v934 = vrot.slane %v933, 2
      %v935 = vadd.f32 %v933, %v934
      %v936 = vrot.slane %v935, 1
      %v937 = vadd.f32 %v935, %v936
      %v938 = vadd.f32 %v886, %v937
      %v939 = vmul.f32 %v741, %v741
      %v940 = vmul.f32 %v743, %v743
      %v941 = vmul.f32 %v746, %v746
      %v942 = vmul.f32 %v748, %v748
      %v943 = vmul.f32 %v751, %v751
      %v944 = vmul.f32 %v753, %v753
      %v945 = vmul.f32 %v756, %v756
      %v946 = vmul.f32 %v758, %v758
      %v947 = vsel %vm760, %v939, 0.0
      %v948 = vsel %vm760, %v940, 0.0
      %v949 = vadd.f32 %v947, %v948
      %v950 = vsel %vm760, %v941, 0.0
      %v951 = vadd.f32 %v949, %v950
      %v952 = vsel %vm760, %v942, 0.0
      %v953 = vadd.f32 %v951, %v952
      %v954 = vsel %vm760, %v943, 0.0
      %v955 = vadd.f32 %v953, %v954
      %v956 = vsel %vm760, %v944, 0.0
      %v957 = vadd.f32 %v955, %v956
      %v958 = vsel %vm760, %v945, 0.0
      %v959 = vadd.f32 %v957, %v958
      %v960 = vsel %vm760, %v946, 0.0
      %v961 = vadd.f32 %v959, %v960
      %v962 = vrot.slane %v961, 4
      %v963 = vadd.f32 %v961, %v962
      %v964 = vrot.slane %v963, 2
      %v965 = vadd.f32 %v963, %v964
      %v966 = vrot.slane %v965, 1
      %v967 = vadd.f32 %v965, %v966
      %v968 = vadd.f32 %v916, %v967
      %v969 = vmul.f32 %v938, 0.00390625
      %v970 = vmul.f32 %v968, 0.00390625
      %v971 = vmul.f32 %v969, %v969
      %v972 = vsub.f32 %v970, %v971
      %v973 = vmax.f32 %v972, 0.0
      %v974 = vadd.f32 %v973, 1e-05
      %v975 = vrsqrt.pop %v974
      %v976 = vmul.f32 %v975, %v974
      %v977 = vmul.f32 %v976, %v975
      %v978 = vmul.f32 0.5, %v977
      %v979 = vsub.f32 1.5, %v978
      %v980 = vmul.f32 %v975, %v979
      %vm981 = vweird.f32 %v974
      %vm982 = vweird.f32 %v975
      %vm983 = vmor %vm981, %vm982
      %v984 = vsel %vm983, %v975, %v980
      %v985 = vsub.f32 %v435, %v969
      %v986 = vsub.f32 %v437, %v969
      %v987 = vsub.f32 %v440, %v969
      %v988 = vsub.f32 %v442, %v969
      %v989 = vsub.f32 %v445, %v969
      %v990 = vsub.f32 %v447, %v969
      %v991 = vsub.f32 %v450, %v969
      %v992 = vsub.f32 %v452, %v969
      %v993 = vmul.f32 %v985, %v984
      %v994 = vmul.f32 %v986, %v984
      %v995 = vmul.f32 %v987, %v984
      %v996 = vmul.f32 %v988, %v984
      %v997 = vmul.f32 %v989, %v984
      %v998 = vmul.f32 %v990, %v984
      %v999 = vmul.f32 %v991, %v984
      %v1000 = vmul.f32 %v992, %v984
      %v1001 = vmax.f32 %v993, 0.0
      %v1002 = vmax.f32 %v994, 0.0
      %v1003 = vmax.f32 %v995, 0.0
      %v1004 = vmax.f32 %v996, 0.0
      %v1005 = vmax.f32 %v997, 0.0
      %v1006 = vmax.f32 %v998, 0.0
      %v1007 = vmax.f32 %v999, 0.0
      %v1008 = vmax.f32 %v1000, 0.0
      %1009 = vst.msk [vmem:[%s180] sm:$0xff] %vm760, %v1001
      %1010 = vst.msk [vmem:[%s180 + $0x8] sm:$0xff] %vm760, %v1002
      %1011 = vst.msk [vmem:[%s180 + $0x10] sm:$0xff] %vm760, %v1003
      %1012 = vst.msk [vmem:[%s180 + $0x18] sm:$0xff] %vm760, %v1004
      %1013 = vst.msk [vmem:[%s180 + $0x20] sm:$0xff] %vm760, %v1005
      %1014 = vst.msk [vmem:[%s180 + $0x28] sm:$0xff] %vm760, %v1006
      %1015 = vst.msk [vmem:[%s180 + $0x30] sm:$0xff] %vm760, %v1007
      %1016 = vst.msk [vmem:[%s180 + $0x38] sm:$0xff] %vm760, %v1008
      %v1017 = vsub.f32 %v593, %v969
      %v1018 = vsub.f32 %v595, %v969
      %v1019 = vsub.f32 %v598, %v969
      %v1020 = vsub.f32 %v600, %v969
      %v1021 = vsub.f32 %v603, %v969
      %v1022 = vsub.f32 %v605, %v969
      %v1023 = vsub.f32 %v608, %v969
      %v1024 = vsub.f32 %v610, %v969
      %v1025 = vmul.f32 %v1017, %v984
      %v1026 = vmul.f32 %v1018, %v984
      %v1027 = vmul.f32 %v1019, %v984
      %v1028 = vmul.f32 %v1020, %v984
      %v1029 = vmul.f32 %v1021, %v984
      %v1030 = vmul.f32 %v1022, %v984
      %v1031 = vmul.f32 %v1023, %v984
      %v1032 = vmul.f32 %v1024, %v984
      %v1033 = vmax.f32 %v1025, 0.0
      %v1034 = vmax.f32 %v1026, 0.0
      %v1035 = vmax.f32 %v1027, 0.0
      %v1036 = vmax.f32 %v1028, 0.0
      %v1037 = vmax.f32 %v1029, 0.0
      %v1038 = vmax.f32 %v1030, 0.0
      %v1039 = vmax.f32 %v1031, 0.0
      %v1040 = vmax.f32 %v1032, 0.0
      %s1041 = scalar_lea.vmem %s180, 64
      %1042 = vst.msk [vmem:[%s1041] sm:$0xff] %vm760, %v1033
      %1043 = vst.msk [vmem:[%s1041 + $0x8] sm:$0xff] %vm760, %v1034
      %1044 = vst.msk [vmem:[%s1041 + $0x10] sm:$0xff] %vm760, %v1035
      %1045 = vst.msk [vmem:[%s1041 + $0x18] sm:$0xff] %vm760, %v1036
      %1046 = vst.msk [vmem:[%s1041 + $0x20] sm:$0xff] %vm760, %v1037
      %1047 = vst.msk [vmem:[%s1041 + $0x28] sm:$0xff] %vm760, %v1038
      %1048 = vst.msk [vmem:[%s1041 + $0x30] sm:$0xff] %vm760, %v1039
      %1049 = vst.msk [vmem:[%s1041 + $0x38] sm:$0xff] %vm760, %v1040
      %v1050 = vsub.f32 %v667, %v969
      %v1051 = vsub.f32 %v669, %v969
      %v1052 = vsub.f32 %v672, %v969
      %v1053 = vsub.f32 %v674, %v969
      %v1054 = vsub.f32 %v677, %v969
      %v1055 = vsub.f32 %v679, %v969
      %v1056 = vsub.f32 %v682, %v969
      %v1057 = vsub.f32 %v684, %v969
      %v1058 = vmul.f32 %v1050, %v984
      %v1059 = vmul.f32 %v1051, %v984
      %v1060 = vmul.f32 %v1052, %v984
      %v1061 = vmul.f32 %v1053, %v984
      %v1062 = vmul.f32 %v1054, %v984
      %v1063 = vmul.f32 %v1055, %v984
      %v1064 = vmul.f32 %v1056, %v984
      %v1065 = vmul.f32 %v1057, %v984
      %v1066 = vmax.f32 %v1058, 0.0
      %v1067 = vmax.f32 %v1059, 0.0
      %v1068 = vmax.f32 %v1060, 0.0
      %v1069 = vmax.f32 %v1061, 0.0
      %v1070 = vmax.f32 %v1062, 0.0
      %v1071 = vmax.f32 %v1063, 0.0
      %v1072 = vmax.f32 %v1064, 0.0
      %v1073 = vmax.f32 %v1065, 0.0
      %s1074 = scalar_lea.vmem %s180, 128
      %1075 = vst.msk [vmem:[%s1074] sm:$0xff] %vm760, %v1066
      %1076 = vst.msk [vmem:[%s1074 + $0x8] sm:$0xff] %vm760, %v1067
      %1077 = vst.msk [vmem:[%s1074 + $0x10] sm:$0xff] %vm760, %v1068
      %1078 = vst.msk [vmem:[%s1074 + $0x18] sm:$0xff] %vm760, %v1069
      %1079 = vst.msk [vmem:[%s1074 + $0x20] sm:$0xff] %vm760, %v1070
      %1080 = vst.msk [vmem:[%s1074 + $0x28] sm:$0xff] %vm760, %v1071
      %1081 = vst.msk [vmem:[%s1074 + $0x30] sm:$0xff] %vm760, %v1072
      %1082 = vst.msk [vmem:[%s1074 + $0x38] sm:$0xff] %vm760, %v1073
      %v1083 = vsub.f32 %v741, %v969
      %v1084 = vsub.f32 %v743, %v969
      %v1085 = vsub.f32 %v746, %v969
      %v1086 = vsub.f32 %v748, %v969
      %v1087 = vsub.f32 %v751, %v969
      %v1088 = vsub.f32 %v753, %v969
      %v1089 = vsub.f32 %v756, %v969
      %v1090 = vsub.f32 %v758, %v969
      %v1091 = vmul.f32 %v1083, %v984
      %v1092 = vmul.f32 %v1084, %v984
      %v1093 = vmul.f32 %v1085, %v984
      %v1094 = vmul.f32 %v1086, %v984
      %v1095 = vmul.f32 %v1087, %v984
      %v1096 = vmul.f32 %v1088, %v984
      %v1097 = vmul.f32 %v1089, %v984
      %v1098 = vmul.f32 %v1090, %v984
      %v1099 = vmax.f32 %v1091, 0.0
      %v1100 = vmax.f32 %v1092, 0.0
      %v1101 = vmax.f32 %v1093, 0.0
      %v1102 = vmax.f32 %v1094, 0.0
      %v1103 = vmax.f32 %v1095, 0.0
      %v1104 = vmax.f32 %v1096, 0.0
      %v1105 = vmax.f32 %v1097, 0.0
      %v1106 = vmax.f32 %v1098, 0.0
      %s1107 = scalar_lea.vmem %s180, 192
      %1108 = vst.msk [vmem:[%s1107] sm:$0xff] %vm760, %v1099
      %1109 = vst.msk [vmem:[%s1107 + $0x8] sm:$0xff] %vm760, %v1100
      %1110 = vst.msk [vmem:[%s1107 + $0x10] sm:$0xff] %vm760, %v1101
      %1111 = vst.msk [vmem:[%s1107 + $0x18] sm:$0xff] %vm760, %v1102
      %1112 = vst.msk [vmem:[%s1107 + $0x20] sm:$0xff] %vm760, %v1103
      %1113 = vst.msk [vmem:[%s1107 + $0x28] sm:$0xff] %vm760, %v1104
      %1114 = vst.msk [vmem:[%s1107 + $0x30] sm:$0xff] %vm760, %v1105
      %1115 = vst.msk [vmem:[%s1107 + $0x38] sm:$0xff] %vm760, %v1106
      %p1116 = scmp.lt.s32.totalorder %s17, 1
      %s1117 = scalar_select %p1116, %s17, 1
      %p1118 = scmp.lt.s32.totalorder %s18, 0
      %s1119 = scalar_select %p1118, %s18, 0
      %s1120 = smul.addr %s1117, 32
      %s1121 = sadd.s32 %s1119, %s1120
      %s1122 = smul.addr %s1121, 8
      %s1123 = scalar_lea.vmem %s2, %s1122
      // Predicated region
      $region29: #{tpu_custom_call.1} parent=27 // pred_check
        %p1124 = pneg %p97
      $region30: #{tpu_custom_call.1} parent=27 // pred_check_branch
        %1126 = sbr.rel (%p1124) target = $region32
      $region31: #{tpu_custom_call.1} parent=27 // pred_region
        _
      $region32: #{tpu_custom_call.1} parent=27 // pred_fallthru
        _
    $region28: #{tpu_custom_call.1} parent=5 // pred_fallthru
      _
    %p1127 = scmp.le.s32.totalorder 2, %s8
    // Predicated region
    $region33: #{tpu_custom_call.1} parent=5 // pred_check
      %p1128 = pneg %p1127
    $region34: #{tpu_custom_call.1} parent=5 // pred_check_branch
      %1130 = sbr.rel (%p1128) target = $region36
    $region35: #{tpu_custom_call.1} parent=5 // pred_region
      %s1131 = ssub.s32 %s8, 2
      // Predicated region
      $region37: #{tpu_custom_call.1} parent=35 // pred_check
        %p1132 = pneg %p103
      $region38: #{tpu_custom_call.1} parent=35 // pred_check_branch
        %1134 = sbr.rel (%p1132) target = $region40
      $region39: #{tpu_custom_call.1} parent=35 // pred_region
        %p1135 = scmp.lt.s32.totalorder %s19, 1
        %s1136 = scalar_select %p1135, %s19, 1
        %p1137 = scmp.lt.s32.totalorder %s20, 0
        %s1138 = scalar_select %p1137, %s20, 0
        %s1139 = smul.addr %s1136, 32
        %s1140 = sadd.s32 %s1138, %s1139
        %s1141 = smul.addr %s1140, 8
        %s1142 = scalar_lea.vmem %s2, %s1141
      $region40: #{tpu_custom_call.1} parent=35 // pred_fallthru
        _
    $region36: #{tpu_custom_call.1} parent=5 // pred_fallthru
      _
  $region6: #{tpu_custom_call.1} parent=0 // loop_footer
    %s12 = sadd.s32 1, %s8
  $region7: #{tpu_custom_call.1} parent=0 // loop_footer_branch
    %7 = sbr.rel target = $region3
  $region8: #{tpu_custom_call.1} parent=0 // loop_exit
    _

</llo_original>
